<compile_context>
chip_gen: v6e
topology: v6e:2x2x1
jax: 0.10.0
libtpu: 0.0.40
codegen_flags: <defaults>
</compile_context>

<pallas_src>
import dataclasses
import math

import jax
import jax.numpy as jnp
from jax.experimental import pallas as pl
from jax.experimental.pallas import tpu as pltpu


# ----------------------------- "utils" constants (deterministic, in-script) ----
CAMERA_HEIGHT = 1.65                     # utils.get_camera_height()  (KITTI)
SATMAP_PROCESS_SIDELENGTH = 512          # utils.get_process_satmap_sidelength()
_SAT_ZOOM = 18
_KITTI_LAT_DEG = 49.015


def get_meter_per_pixel():
    # utils.get_meter_per_pixel(): web-mercator ground resolution at KITTI latitude.
    # Returned as a Python float so it folds into the host-side coefficient math.
    return 156543.03392 * math.cos(_KITTI_LAT_DEG * math.pi / 180.0) / (2.0 ** _SAT_ZOOM)


@dataclasses.dataclass
class Args:
    shift_range_lat: float = 20.0
    shift_range_lon: float = 20.0
    damping: float = 0.1
    level: int = 1
    N_iters: int = 5
    using_weight: bool = True


# ----------------------------- plain-JAX glue (tiny tensors only) --------------
def get_warp_sat2real(A):
    """Pure-JAX replica of KITTI_S2G.get_warp_sat2real -> (A, A, 4).
    Used only by the reference check; the kernel regenerates this grid from iota."""
    h = jnp.arange(A, dtype=jnp.float32)
    w = jnp.arange(A, dtype=jnp.float32)
    ii, jj = jnp.meshgrid(h, w, indexing="ij")
    u0 = v0 = A // 2
    mpp = get_meter_per_pixel() * (SATMAP_PROCESS_SIDELENGTH / A)
    X = mpp * (ii - v0)
    Z = mpp * (jj - u0)
    Y = jnp.zeros_like(X)
    ones = jnp.ones_like(X)
    return jnp.stack([X, Y, Z, ones], axis=-1)           # (A, A, 4)


def get_E(shift_u, shift_v, heading, args):
    """Replicates KITTI_S2G.get_E -> (B, 3, 4)."""
    B = shift_u.shape[0]
    shift_u_m = args.shift_range_lat * shift_u
    shift_v_m = args.shift_range_lon * shift_v
    heading = heading * 10.0 / 180.0 * jnp.pi
    cos = jnp.cos(-heading)
    sin = jnp.sin(-heading)
    zeros = jnp.zeros_like(cos)
    ones = jnp.ones_like(cos)
    R = jnp.concatenate(
        [cos, zeros, -sin, zeros, ones, zeros, sin, zeros, cos], axis=-1
    ).reshape(B, 3, 3)
    height = CAMERA_HEIGHT * jnp.ones_like(shift_u_m)
    T = jnp.concatenate([shift_v_m, height, -shift_u_m], axis=-1)[..., None]  # (B,3,1)
    return jnp.concatenate([R, T], axis=-1)                                   # (B,3,4)


def get_I(ori_camera_k, grd_W, ori_grdW, grd_H, ori_grdH):
    """Replicates KITTI_S2G.get_I -> (B, 3, 3)."""
    row0 = ori_camera_k[:, 0:1, :] * (grd_W / ori_grdW)
    row1 = ori_camera_k[:, 1:2, :] * (grd_H / ori_grdH)
    row2 = ori_camera_k[:, 2:3, :]
    return jnp.concatenate([row0, row1, row2], axis=1)


# ----------------------------- Pallas kernel: seq_warp_real2camera -------------
def _pick_tile_rows(A, B, max_block_bytes=4 << 20):
    """Pick tile_r such that:
         * tile_r divides A and (tile_r % 8 == 0 or tile_r == A)   [layout rule]
         * the f32 (tile_r, 2A) output block is <= max_block_bytes
         * the grid keeps >= 2 steps when A allows it (v7x megacore)."""
    bytes_per_row = 8 * A                       # 2A lanes * 4 B
    max_rows = max(1, max_block_bytes // bytes_per_row)

    def best_divisor(limit):
        best = 0
        d = 1
        while d * d <= A:
            if A % d == 0:
                for cand in (d, A // d):
                    if cand <= limit and (cand % 8 == 0 or cand == A):
                        best = max(best, cand)
            d += 1
        return best

    tile_r = best_divisor(min(max_rows, A))
    if tile_r == 0:
        tile_r = A                              # rare fallback (odd A); VMEM limit raised

    # v7x megacore: keep at least 2 parallel grid steps when possible.
    if B * (A // tile_r) < 2:
        smaller = best_divisor(A // 2)
        if smaller:
            tile_r = smaller
    return tile_r


def _make_warp_kernel(tile_r, A):
    two_a = 2 * A

    def warp_kernel(q_ref, out_ref):
        """One (batch, row-tile) grid step of the projective warp.

        q_ref   : SMEM (B*9,) f32 -- per batch [q00,q02,q03, q10,q12,q13, q20,q22,q23]
                  with satmap scale & center pre-folded in (Y column dropped, Y == 0).
        out_ref : VMEM (1, tile_r, 2A) f32 -- interleaved (u, v): even lanes u, odd v.
        """
        b = pl.program_id(0)
        r = pl.program_id(1)
        base = b * 9

        lane = jax.lax.broadcasted_iota(jnp.int32, (tile_r, two_a), 1)
        row = jax.lax.broadcasted_iota(jnp.int32, (tile_r, two_a), 0) + r * tile_r
        col = lane >> 1
        is_v = (lane & 1) == 1

        i_f = row.astype(jnp.float32)
        j_f = col.astype(jnp.float32)

        q00 = q_ref[base + 0]
        q02 = q_ref[base + 1]
        q03 = q_ref[base + 2]
        q10 = q_ref[base + 3]
        q12 = q_ref[base + 4]
        q13 = q_ref[base + 5]
        q20 = q_ref[base + 6]
        q22 = q_ref[base + 7]
        q23 = q_ref[base + 8]

        # per-lane coefficient set: even lane -> u-row, odd lane -> v-row
        ca = jnp.where(is_v, q10, q00)
        cb = jnp.where(is_v, q12, q02)
        cc = jnp.where(is_v, q13, q03)

        num = ca * i_f + cb * j_f + cc
        w = q20 * i_f + q22 * j_f + q23
        w = jnp.maximum(w, jnp.float32(1e-6))

        inv = pl.reciprocal(w, approx=True)      # EUP slot (idle otherwise)
        inv = inv * (2.0 - w * inv)              # one Newton step -> ~f32 accurate

        out_ref[0] = num * inv

    return warp_kernel


def seq_warp_real2camera_pallas(E_inv, I_inv, A):
    """Pallas version of KITTI_S2G.seq_warp_real2camera -> (B, A, A, 2)."""
    B = E_inv.shape[0]
    P = jnp.einsum("bij,bjk->bik", I_inv, E_inv).astype(jnp.float32)   # (B, 3, 4) tiny glue

    # Fold satmap scale & pixel-center into the projection coefficients (Y column
    # dropped since Y == 0 identically):  coef·[i, j, 1] == P·[X, 0, Z, 1].
    scale = float(get_meter_per_pixel() * (SATMAP_PROCESS_SIDELENGTH / A))
    center = float(A // 2)
    qa = scale * P[:, :, 0]                                            # * row index i
    qb = scale * P[:, :, 2]                                            # * col index j
    qc = P[:, :, 3] - scale * center * (P[:, :, 0] + P[:, :, 2])       # constant
    q_flat = jnp.stack([qa, qb, qc], axis=-1).reshape(B * 9)           # SMEM scalars

    tile_r = _pick_tile_rows(A, B)
    kernel = _make_warp_kernel(tile_r, A)

    block_bytes = tile_r * 2 * A * 4
    vmem_limit = int(min(max(2 * block_bytes + (1 << 20), 32 << 20), 64 << 20))

    n_pix = B * A * A
    cost = pl.CostEstimate(flops=20 * n_pix, transcendentals=n_pix,
                           bytes_accessed=8 * n_pix + B * 9 * 4)

    out = pl.pallas_call(
        kernel,
        out_shape=jax.ShapeDtypeStruct((B, A, 2 * A), jnp.float32),
        grid=(B, A // tile_r),
        in_specs=[pl.BlockSpec(memory_space=pltpu.MemorySpace.SMEM)],
        out_specs=pl.BlockSpec((1, tile_r, 2 * A), lambda b, r: (b, r, 0)),
        compiler_params=pltpu.CompilerParams(
            dimension_semantics=("parallel", "parallel"),
            vmem_limit_bytes=vmem_limit,
        ),
        cost_estimate=cost,
    )(q_flat)                                                          # (B, A, 2A)

    # Contiguous (free) reshape: even lanes were u, odd lanes v -> (..., 2) ordering.
    return out.reshape(B, A, A, 2)


# ----------------------------- KITTI_S2G.forward --------------------------------
def kitti_s2g_forward(sat_map, grd_img_left, left_camera_k, args):
    B, _, ori_grdH, ori_grdW = grd_img_left.shape
    A = sat_map.shape[-1]

    # learnable zero-initialised pose offsets (exactly as in the torch forward)
    shift_u = jnp.zeros((B, 1), jnp.float32)
    shift_v = jnp.zeros((B, 1), jnp.float32)
    heading = jnp.zeros((B, 1), jnp.float32)

    # F.interpolate(grd_img_left, size=(128, 512)) -- its pixel values are never
    # consumed in forward(); only the target size (H=128, W=512) feeds get_I.
    # TODO(synk): bilinear resize elided as dead compute (output unused downstream).
    H, W = 128, 512

    E_inv = get_E(shift_u, shift_v, heading, args)                # (B, 3, 4)
    I_inv = get_I(left_camera_k, W, ori_grdW, H, ori_grdH)        # (B, 3, 3)
    return seq_warp_real2camera_pallas(E_inv, I_inv, A)           # (B, A, A, 2)


# ----------------------------- main ---------------------------------------------
if __name__ == "__main__":
    args = Args()

    # deterministic "parameter" from __init__ (unused in forward, kept for fidelity)
    damping_param = args.damping * jnp.ones((1, 3), jnp.float32)
    del damping_param
    # TODO(synk): ResNet18 feature nets and RAFT from __init__ are never called in
    # forward(); they are intentionally not instantiated here.

    key = jax.random.PRNGKey(0)
    k1, k2 = jax.random.split(key)

    B, C, A = 2, 4, 16
    ori_grdH, ori_grdW = 16, 32

    sat_map = jax.random.normal(k1, (B, C, A, A), jnp.float32)          # [B, C, A, A]
    grd_img_left = jax.random.normal(k2, (B, C, ori_grdH, ori_grdW), jnp.float32)

    fx, fy = 160.0, 160.0
    cx, cy = ori_grdW / 2.0, ori_grdH / 2.0
    K = jnp.array([[fx, 0.0, cx], [0.0, fy, cy], [0.0, 0.0, 1.0]], jnp.float32)
    left_camera_k = jnp.tile(K[None], (B, 1, 1))                        # [B, 3, 3]

    uv = kitti_s2g_forward(sat_map, grd_img_left, left_camera_k, args)
    uv = jax.block_until_ready(uv)

    # pure-JAX reference of seq_warp_real2camera for correctness
    XYZ_1 = get_warp_sat2real(A)
    E_inv = get_E(jnp.zeros((B, 1), jnp.float32), jnp.zeros((B, 1), jnp.float32),
                  jnp.zeros((B, 1), jnp.float32), args)
    I_inv = get_I(left_camera_k, 512, ori_grdW, 128, ori_grdH)
    P = jnp.einsum("bij,bjk->bik", I_inv, E_inv)
    uv1_ref = jnp.einsum("bij,hwj->bhwi", P, XYZ_1)
    uv_ref = uv1_ref[..., :2] / jnp.maximum(uv1_ref[..., 2:], 1e-6)

    assert uv.shape == (B, A, A, 2)
    assert jnp.allclose(uv, uv_ref, atol=1e-4, rtol=1e-4)
    print("KERNEL_OK")
</pallas_src>

<mosaic_0001>
module attributes {stable_mosaic.version = 11 : i64} {
  func.func @warp_kernel(%arg0: i32, %arg1: i32, %arg2: memref<18xf32, #tpu.memory_space<smem>>, %arg3: memref<1x16x32xf32, #tpu.memory_space<vmem>>) attributes {dimension_semantics = [#tpu.dimension_semantics<parallel>, #tpu.dimension_semantics<parallel>], iteration_bounds = array<i64: 2, 1>, scalar_prefetch = 0 : i64, scratch_operands = 0 : i64, tpu.core_type = #tpu.core_type<tc>, window_params = [{transform_indices = @transform_0, window_bounds = array<i64: 18>}, {transform_indices = @transform_1, window_bounds = array<i64: 1, 16, 32>}]} {
    %c9_i32 = arith.constant 9 : i32
    %0 = arith.muli %arg0, %c9_i32 : i32
    %1 = tpu.iota {dimensions = array<i32: 1>} : vector<16x32xi32>
    %2 = tpu.iota {dimensions = array<i32: 0>} : vector<16x32xi32>
    %c16_i32 = arith.constant 16 : i32
    %3 = arith.muli %arg1, %c16_i32 : i32
    %4 = vector.broadcast %3 : i32 to vector<16x32xi32>
    %5 = arith.addi %2, %4 : vector<16x32xi32>
    %c1_i32 = arith.constant 1 : i32
    %6 = vector.broadcast %c1_i32 : i32 to vector<16x32xi32>
    %7 = arith.shrsi %1, %6 : vector<16x32xi32>
    %c1_i32_0 = arith.constant 1 : i32
    %8 = vector.broadcast %c1_i32_0 : i32 to vector<16x32xi32>
    %9 = arith.andi %1, %8 : vector<16x32xi32>
    %c1_i32_1 = arith.constant 1 : i32
    %10 = vector.broadcast %c1_i32_1 : i32 to vector<16x32xi32>
    %11 = arith.cmpi eq, %9, %10 : vector<16x32xi32>
    %12 = arith.sitofp %5 : vector<16x32xi32> to vector<16x32xf32>
    %13 = arith.sitofp %7 : vector<16x32xi32> to vector<16x32xf32>
    %c0_i32 = arith.constant 0 : i32
    %14 = arith.addi %0, %c0_i32 : i32
    %15 = arith.index_cast %14 : i32 to index
    %16 = memref.load %arg2[%15] : memref<18xf32, #tpu.memory_space<smem>>
    %c1_i32_2 = arith.constant 1 : i32
    %17 = arith.addi %0, %c1_i32_2 : i32
    %18 = arith.index_cast %17 : i32 to index
    %19 = memref.load %arg2[%18] : memref<18xf32, #tpu.memory_space<smem>>
    %c2_i32 = arith.constant 2 : i32
    %20 = arith.addi %0, %c2_i32 : i32
    %21 = arith.index_cast %20 : i32 to index
    %22 = memref.load %arg2[%21] : memref<18xf32, #tpu.memory_space<smem>>
    %c3_i32 = arith.constant 3 : i32
    %23 = arith.addi %0, %c3_i32 : i32
    %24 = arith.index_cast %23 : i32 to index
    %25 = memref.load %arg2[%24] : memref<18xf32, #tpu.memory_space<smem>>
    %c4_i32 = arith.constant 4 : i32
    %26 = arith.addi %0, %c4_i32 : i32
    %27 = arith.index_cast %26 : i32 to index
    %28 = memref.load %arg2[%27] : memref<18xf32, #tpu.memory_space<smem>>
    %c5_i32 = arith.constant 5 : i32
    %29 = arith.addi %0, %c5_i32 : i32
    %30 = arith.index_cast %29 : i32 to index
    %31 = memref.load %arg2[%30] : memref<18xf32, #tpu.memory_space<smem>>
    %c6_i32 = arith.constant 6 : i32
    %32 = arith.addi %0, %c6_i32 : i32
    %33 = arith.index_cast %32 : i32 to index
    %34 = memref.load %arg2[%33] : memref<18xf32, #tpu.memory_space<smem>>
    %c7_i32 = arith.constant 7 : i32
    %35 = arith.addi %0, %c7_i32 : i32
    %36 = arith.index_cast %35 : i32 to index
    %37 = memref.load %arg2[%36] : memref<18xf32, #tpu.memory_space<smem>>
    %c8_i32 = arith.constant 8 : i32
    %38 = arith.addi %0, %c8_i32 : i32
    %39 = arith.index_cast %38 : i32 to index
    %40 = memref.load %arg2[%39] : memref<18xf32, #tpu.memory_space<smem>>
    %41 = vector.broadcast %25 : f32 to vector<16x32xf32>
    %42 = vector.broadcast %16 : f32 to vector<16x32xf32>
    %43 = arith.select %11, %41, %42 : vector<16x32xi1>, vector<16x32xf32>
    %44 = vector.broadcast %28 : f32 to vector<16x32xf32>
    %45 = vector.broadcast %19 : f32 to vector<16x32xf32>
    %46 = arith.select %11, %44, %45 : vector<16x32xi1>, vector<16x32xf32>
    %47 = vector.broadcast %31 : f32 to vector<16x32xf32>
    %48 = vector.broadcast %22 : f32 to vector<16x32xf32>
    %49 = arith.select %11, %47, %48 : vector<16x32xi1>, vector<16x32xf32>
    %50 = arith.mulf %43, %12 : vector<16x32xf32>
    %51 = arith.mulf %46, %13 : vector<16x32xf32>
    %52 = arith.addf %50, %51 : vector<16x32xf32>
    %53 = arith.addf %52, %49 : vector<16x32xf32>
    %54 = vector.broadcast %34 : f32 to vector<16x32xf32>
    %55 = arith.mulf %54, %12 : vector<16x32xf32>
    %56 = vector.broadcast %37 : f32 to vector<16x32xf32>
    %57 = arith.mulf %56, %13 : vector<16x32xf32>
    %58 = arith.addf %55, %57 : vector<16x32xf32>
    %59 = vector.broadcast %40 : f32 to vector<16x32xf32>
    %60 = arith.addf %58, %59 : vector<16x32xf32>
    %cst = arith.constant 9.99999997E-7 : f32
    %61 = vector.broadcast %cst : f32 to vector<16x32xf32>
    %62 = arith.maximumf %60, %61 : vector<16x32xf32>
    %63 = tpu.reciprocal %62 {approx = true} : vector<16x32xf32> -> vector<16x32xf32>
    %64 = arith.mulf %62, %63 : vector<16x32xf32>
    %cst_3 = arith.constant 2.000000e+00 : f32
    %65 = vector.broadcast %cst_3 : f32 to vector<16x32xf32>
    %66 = arith.subf %65, %64 : vector<16x32xf32>
    %67 = arith.mulf %63, %66 : vector<16x32xf32>
    %68 = arith.mulf %53, %67 : vector<16x32xf32>
    %c0 = arith.constant 0 : index
    %c0_4 = arith.constant 0 : index
    %c0_5 = arith.constant 0 : index
    %69 = vector.load %arg3[%c0, %c0_4, %c0_5] : memref<1x16x32xf32, #tpu.memory_space<vmem>>, vector<1x16x32xf32>
    %70 = vector.shape_cast %69 : vector<1x16x32xf32> to vector<16x32xf32>
    %71 = vector.shape_cast %68 : vector<16x32xf32> to vector<1x16x32xf32>
    tpu.vector_store %arg3[%c0, %c0_4, %c0_5], %71 {strides = array<i32>} : memref<1x16x32xf32, #tpu.memory_space<vmem>>, vector<1x16x32xf32>,
    return
  }
  func.func @transform_0(%arg0: i32, %arg1: i32) -> i32 {
    %c0_i32 = arith.constant 0 : i32
    %c0_i32_0 = arith.constant 0 : i32
    return %c0_i32 : i32
  }
  func.func @transform_1(%arg0: i32, %arg1: i32) -> (i32, i32, i32) {
    %c0_i32 = arith.constant 0 : i32
    %c0_i32_0 = arith.constant 0 : i32
    return %arg0, %arg1, %c0_i32 : i32, i32, i32
  }
}

</mosaic_0001>

<llo_original>
// kernel: tpu_custom_call.1
$region0: #{tpu_custom_call.1}
  #allocation0 [shape = 'u32[]', space=smem, size = 0x4, offset = 0x4, fixed_abs, tag = 'smem constant byte address 0x4 - core index']
  #allocation1 [shape = 'u32[144,128]{1,0:T(1,128)}', space=vmem, size = 0x12000, scoped, tag = 'internal scratch']
  %s0 = inlined_call_operand.hbm [shape: f32[18], index: 0, kind: input, shape index: {}]
  %s1 = inlined_call_operand.hbm [shape: f32[2,16,32], index: 1, kind: output, shape index: {}]
  %s2 = sld [smem:[#allocation0]]
  $region41: #{tpu_custom_call.1} parent=0
    _
  %s4 = ssub.s32 1, %s2
  %s5 = scalar_select 0, %s4, %s2
  $region1: #{tpu_custom_call.1} parent=0
    #allocation2 [shape = 'u8[512]{0}', space=smem, size = 0x200, scoped, tag = 'input window, operand 0, single buffered']
    #allocation3 [shape = 's32[2]{0}', space=sflag, size = 0x8, scoped, tag = 'scoped memory for tpu_custom_call.1']
    #allocation4 [shape = 's32[2]{0}', space=sflag, size = 0x8, scoped, tag = 'scoped memory for tpu_custom_call.1']
    #allocation5 [shape = 'u8[16384]{0}', space=vmem, size = 0x4000, scoped, tag = 'output window, operand 0']
    %6 = vsyncpa [#allocation4], 0
    %7 = vsyncpa [#allocation3], 0
    %s8 = scalar_lea.sflag [#allocation3], 1
    %9 = vsyncpa %s8, 0
    loop: start=0, step=1, limit=4
    $region2: #{tpu_custom_call.1} parent=1 // loop_pre_header
      _
    $region3: #{tpu_custom_call.1} parent=1 // loop_header
      %s11 = sphi 0, %s15
      %p12 = scmp.ge.s32.totalorder %s11, 4
      %s18 = sphi 0, %s30
      %s19 = sphi 0, %s26
      %s20 = sphi 0, %s18
      %s21 = sphi 0, %s19
      %s22 = sphi 0, %s20
      %s23 = sphi 0, %s21
      %s31 = sphi 0, %s31
      %s33 = sphi 0, %s31
      %s34 = sphi 0, %s33
      %s48 = sphi 0, %s34
      %s56 = sphi 0, %s58
      %s59 = sphi 0, %s56
      %s60 = sphi 0, %s59
      %s76 = sphi 0, %s60
    $region4: #{tpu_custom_call.1} parent=1 // loop_header_branch
      %14 = sbr.rel (%p12) target = $region8
    $region5: #{tpu_custom_call.1} parent=1 // loop_body
      %s16 = ssub.s32 %s11, 1
      %s17 = ssub.s32 %s11, 2
      %s24 = sadd.s32 1, %s19
      %p25 = scmp.ge.s32.totalorder %s24, 1
      %s26 = scalar_select %p25, 0, %s24
      %s27 = sadd.s32 1, %s18
      %s28 = scalar_select %p25, %s27, %s18
      %p29 = scmp.ge.s32.totalorder %s28, 2
      %s30 = scalar_select %p29, 0, %s28
      %s32 = sadd.s32 %s31, 1
      %p35 = scmp.eq.s32.totalorder %s11, 1
      %p36 = scmp.ne.s32.totalorder %s31, %s33
      %p37 = scmp.eq.s32.totalorder %s11, 0
      %p38 = por %p36, %p37
      %p39 = scmp.ne.s32.totalorder %s31, %s33
      %p40 = scmp.eq.s32.totalorder %s16, 1
      %p41 = por %p39, %p40
      %p42 = scmp.ne.s32.totalorder %s33, %s34
      %p43 = scmp.eq.s32.totalorder %s16, 0
      %p44 = por %p42, %p43
      %p45 = scmp.ne.s32.totalorder %s33, %s34
      %p46 = scmp.eq.s32.totalorder %s17, 1
      %p47 = por %p45, %p46
      %p49 = scmp.ne.s32.totalorder %s34, %s48
      %p50 = scmp.eq.s32.totalorder %s17, 0
      %p51 = por %p49, %p50
      %s52 = ssub.s32 %s18, %s30
      %s53 = ssub.s32 %s19, %s26
      %s54 = sor.u32 %s52, %s53
      %p55 = scmp.eq.s32.totalorder %s54, 0
      %s57 = sadd.s32 %s56, 1
      %s58 = scalar_select %p55, %s56, %s57
      %p61 = pneg %p55
      %p62 = scmp.eq.s32.totalorder %s11, 1
      %p63 = por %p61, %p62
      %p64 = scmp.ne.s32.totalorder %s56, %s59
      %p65 = scmp.eq.s32.totalorder %s11, 0
      %p66 = por %p64, %p65
      %p67 = scmp.ne.s32.totalorder %s56, %s59
      %p68 = scmp.eq.s32.totalorder %s16, 1
      %p69 = por %p67, %p68
      %p70 = scmp.ne.s32.totalorder %s59, %s60
      %p71 = scmp.eq.s32.totalorder %s16, 0
      %p72 = por %p70, %p71
      %p73 = scmp.ne.s32.totalorder %s59, %s60
      %p74 = scmp.eq.s32.totalorder %s17, 1
      %p75 = por %p73, %p74
      %p77 = scmp.ne.s32.totalorder %s60, %s76
      %p78 = scmp.eq.s32.totalorder %s17, 0
      %p79 = por %p77, %p78
      %p80 = scmp.le.s32.totalorder 1, %s11
      %p81 = scmp.lt.s32.totalorder %s11, 3
      %p82 = pnand %p80, %p81
      %p83 = pneg %p82
      // Predicated region
      $region9: #{tpu_custom_call.1} parent=5 // pred_check
        _
      $region10: #{tpu_custom_call.1} parent=5 // pred_check_branch
        %85 = sbr.rel (%p82) target = $region12
      $region11: #{tpu_custom_call.1} parent=5 // pred_region
        %s86 = ssub.s32 %s11, 1
        // Predicated region
        $region13: #{tpu_custom_call.1} parent=11 // pred_check
          %p87 = pneg %p44
        $region14: #{tpu_custom_call.1} parent=11 // pred_check_branch
          %89 = sbr.rel (%p87) target = $region16
        $region15: #{tpu_custom_call.1} parent=11 // pred_region
          %s91 = ssub.s32 16, 16
          %92 = vsyncadd [#allocation4], %s91
          %95 = dma.hbm_to_smem %s0, 16, [#allocation2], [#allocation4]
        $region16: #{tpu_custom_call.1} parent=11 // pred_fallthru
          _
      $region12: #{tpu_custom_call.1} parent=5 // pred_fallthru
        _
      %p96 = scmp.lt.s32.totalorder %s11, 2
      // Predicated region
      $region17: #{tpu_custom_call.1} parent=5 // pred_check
        %p97 = pneg %p96
      $region18: #{tpu_custom_call.1} parent=5 // pred_check_branch
        %99 = sbr.rel (%p97) target = $region20
      $region19: #{tpu_custom_call.1} parent=5 // pred_region
        _
      $region20: #{tpu_custom_call.1} parent=5 // pred_fallthru
        _
      %p100 = scmp.le.s32.totalorder 1, %s11
      %p101 = scmp.lt.s32.totalorder %s11, 3
      %p102 = pnand %p100, %p101
      %p103 = pneg %p102
      // Predicated region
      $region21: #{tpu_custom_call.1} parent=5 // pred_check
        _
      $region22: #{tpu_custom_call.1} parent=5 // pred_check_branch
        %105 = sbr.rel (%p102) target = $region24
      $region23: #{tpu_custom_call.1} parent=5 // pred_region
        %s106 = ssub.s32 %s11, 1
        // Predicated region
        $region25: #{tpu_custom_call.1} parent=23 // pred_check
          %p107 = pneg %p44
        $region26: #{tpu_custom_call.1} parent=23 // pred_check_branch
          %109 = sbr.rel (%p107) target = $region28
        $region27: #{tpu_custom_call.1} parent=23 // pred_region
          %110 = dma.done [#allocation4], 16
        $region28: #{tpu_custom_call.1} parent=23 // pred_fallthru
          _
        %111 = sfence
        %p112 = pneg %p44
        %p113 = pneg %p41
        %p114 = pneg %p72
        %p115 = pneg %p69
        %s116 = sand.u32 %s59, 1
        %s117 = scalar_lea.sflag [#allocation3], %s116
        %s118 = sand.u32 %s59, 1
        %s119 = smul.addr %s118, 16
        %s120 = scalar_lea.vmem [#allocation5], %s119
        %s121 = smul.u32 2, %s21
        %s122 = smul.u32 %s20, 9
        %v123 = vlaneseq
        %v124 = vand.u32 %v123, 127
        %v125 = vlaneseq
        %v126 = vshrl.u32 %v125, 7
        %v127 = vadd.s32 %v126, 8
        %s128 = smul.u32 %s21, 16
        %v129 = vstv %s128
        %v130 = vadd.s32 %v126, %v129
        %v131 = vadd.s32 %v127, %v129
        %v132 = vshra.s32 %v124, 1
        %v133 = vand.u32 %v124, 1
        %vm134 = vcmp.eq.s32.totalorder %v133, 1
        %v135 = vcvt.s32.f32 %v130
        %v136 = vcvt.s32.f32 %v131
        %v137 = vcvt.s32.f32 %v132
        %s138 = sld [smem:[#allocation2 + %s122]]
        %s139 = sadd.s32 %s122, 1
        %s140 = sld [smem:[#allocation2 + %s139]]
        %s141 = sadd.s32 %s122, 2
        %s142 = sld [smem:[#allocation2 + %s141]]
        %s143 = sadd.s32 %s122, 3
        %s144 = sld [smem:[#allocation2 + %s143]]
        %s145 = sadd.s32 %s122, 4
        %s146 = sld [smem:[#allocation2 + %s145]]
        %s147 = sadd.s32 %s122, 5
        %s148 = sld [smem:[#allocation2 + %s147]]
        %s149 = sadd.s32 %s122, 6
        %s150 = sld [smem:[#allocation2 + %s149]]
        %s151 = sadd.s32 %s122, 7
        %s152 = sld [smem:[#allocation2 + %s151]]
        %s153 = sadd.s32 %s122, 8
        %s154 = sld [smem:[#allocation2 + %s153]]
        %v155 = vstv %s144
        %v156 = vstv %s138
        %v157 = vsel %vm134, %v155, %v156
        %v158 = vstv %s146
        %v159 = vstv %s140
        %v160 = vsel %vm134, %v158, %v159
        %v161 = vstv %s148
        %v162 = vstv %s142
        %v163 = vsel %vm134, %v161, %v162
        %v164 = vmul.f32 %v157, %v135
        %v165 = vmul.f32 %v157, %v136
        %v166 = vmul.f32 %v160, %v137
        %v167 = vadd.f32 %v164, %v166
        %v168 = vadd.f32 %v165, %v166
        %v169 = vadd.f32 %v167, %v163
        %v170 = vadd.f32 %v168, %v163
        %v171 = vstv %s150
        %v172 = vmul.f32 %v171, %v135
        %v173 = vmul.f32 %v171, %v136
        %v174 = vstv %s152
        %v175 = vmul.f32 %v174, %v137
        %v176 = vadd.f32 %v172, %v175
        %v177 = vadd.f32 %v173, %v175
        %v178 = vstv %s154
        %v179 = vadd.f32 %v176, %v178
        %v180 = vadd.f32 %v177, %v178
        %v181 = vmax.f32 %v179, 1e-06
        %v182 = vmax.f32 %v180, 1e-06
        %v183 = vrcp.pop %v181
        %v184 = vrcp.pop %v182
        %v185 = vmul.f32 %v181, %v183
        %v186 = vmul.f32 %v182, %v184
        %v187 = vsub.f32 2.0, %v185
        %v188 = vsub.f32 2.0, %v186
        %v189 = vmul.f32 %v183, %v187
        %v190 = vmul.f32 %v184, %v188
        %v191 = vmul.f32 %v169, %v189
        %v192 = vmul.f32 %v170, %v190
        %vm193 = vcmask 261120
        %194 = vst.msk [vmem:[%s120] sm:$0xff] %vm193, %v191
        %195 = vst.msk [vmem:[%s120 + $0x8] sm:$0xff] %vm193, %v192
        %s196 = sand.u32 %s59, 1
        %s197 = scalar_lea.sflag [#allocation3], %s196
        %s198 = sand.u32 %s59, 1
        %s199 = smul.addr %s198, 16
        %s200 = scalar_lea.vmem [#allocation5], %s199
        // Predicated region
        $region29: #{tpu_custom_call.1} parent=23 // pred_check
          %p201 = pneg %p69
        $region30: #{tpu_custom_call.1} parent=23 // pred_check_branch
          %203 = sbr.rel (%p201) target = $region32
        $region31: #{tpu_custom_call.1} parent=23 // pred_region
          %s204 = smul.u32 2, %s21
          %s206 = ssub.s32 256, 256
          %207 = vsyncadd %s197, %s206
          %s208 = smul.addr %s20, 2
          %s209 = sadd.s32 %s204, %s208
          %s210 = smul.addr %s209, 128
          %s211 = scalar_lea.hbm %s1, %s210
          %s212 = sshll.u32 %s200, 4
          %s213 = int_to_ptr.vmem [resolvable:$true] %s212
          %218 = dma.vmem_to_hbm [thread:$0]  %s213, 256, %s211, %s197, 128, 128, 8
        $region32: #{tpu_custom_call.1} parent=23 // pred_fallthru
          _
      $region24: #{tpu_custom_call.1} parent=5 // pred_fallthru
        _
      %p219 = scmp.le.s32.totalorder 2, %s11
      // Predicated region
      $region33: #{tpu_custom_call.1} parent=5 // pred_check
        %p220 = pneg %p219
      $region34: #{tpu_custom_call.1} parent=5 // pred_check_branch
        %222 = sbr.rel (%p220) target = $region36
      $region35: #{tpu_custom_call.1} parent=5 // pred_region
        %s223 = ssub.s32 %s11, 2
        // Predicated region
        $region37: #{tpu_custom_call.1} parent=35 // pred_check
          %p224 = pneg %p75
        $region38: #{tpu_custom_call.1} parent=35 // pred_check_branch
          %226 = sbr.rel (%p224) target = $region40
        $region39: #{tpu_custom_call.1} parent=35 // pred_region
          %s227 = sand.u32 %s60, 1
          %s228 = scalar_lea.sflag [#allocation3], %s227
          %s229 = sand.u32 %s60, 1
          %s230 = smul.addr %s229, 16
          %s231 = scalar_lea.vmem [#allocation5], %s230
          %232 = dma.done %s228, 256
        $region40: #{tpu_custom_call.1} parent=35 // pred_fallthru
          _
      $region36: #{tpu_custom_call.1} parent=5 // pred_fallthru
        _
    $region6: #{tpu_custom_call.1} parent=1 // loop_footer
      %s15 = sadd.s32 1, %s11
    $region7: #{tpu_custom_call.1} parent=1 // loop_footer_branch
      %10 = sbr.rel target = $region3
    $region8: #{tpu_custom_call.1} parent=1 // loop_exit
      _
    %233 = vsyncpa [#allocation3], 1
    %s234 = scalar_lea.sflag [#allocation3], 1
    %235 = vsyncpa %s234, 1
    %236 = vsyncpa [#allocation4], 1
    %s237 = scalar_lea.sflag [#allocation4], 1
    %238 = vsyncpa %s237, 1

</llo_original>
